<compile_context>
chip_gen: v6e
topology: v6e:2x2x1
jax: 0.10.0
libtpu: 0.0.40
codegen_flags: <defaults>
</compile_context>

<pallas_src>
import functools

import jax
import jax.numpy as jnp
from jax.experimental import pallas as pl
from jax.experimental.pallas import tpu as pltpu


def _round_up(x, m):
    return ((x + m - 1) // m) * m


# ----------------------------------------------------------------------------
# Kernel
# ----------------------------------------------------------------------------
def _actor_critic_kernel(
    x_ref,
    w0_ref, b0_ref, w1_ref, b1_ref, w2_ref, b2_ref, w3_ref, b3_ref,
    out_ref,
    *, price_min, price_delta,
):
    # Activations ride in the weight dtype (bf16 by default): MXU consumes
    # bf16 with f32 accumulation, and the bias/ReLU epilogue stays packed.
    act_dt = w0_ref.dtype
    x = x_ref[...].astype(act_dt)  # no-op: wrapper already feeds this dtype

    def layer(h, w_ref, b_ref):
        # f32 accumulation in the MXU; bias-add + ReLU in the weight dtype so
        # the activation fed to the next matmul needs no extra cast.
        y = jnp.dot(h, w_ref[...], preferred_element_type=jnp.float32)
        y = y.astype(b_ref.dtype) + b_ref[...]
        return jnp.maximum(y, 0)

    # Block-diagonal fused critic+actor trunk (exact: off-diagonal blocks = 0).
    h = layer(x, w0_ref, b0_ref)          # (TB, 192)
    h = layer(h, w1_ref, b1_ref)          # (TB, 256)
    h = layer(h, w2_ref, b2_ref)          # (TB, 192)

    # Head: (TB, 2), f32 bias-add (b3 kept f32 to protect critic precision).
    y = jnp.dot(h, w3_ref[...], preferred_element_type=jnp.float32) + b3_ref[...]

    # col 0: raw critic value; col 1: Mul(0.001) -> Sigmoid -> price range.
    out_ref[:, 0:1] = y[:, 0:1].astype(out_ref.dtype)
    actor = jax.nn.sigmoid(y[:, 1:2] * 0.001) * price_delta + price_min
    out_ref[:, 1:2] = actor.astype(out_ref.dtype)


# ----------------------------------------------------------------------------
# Parameter packing (PyTorch-layout params -> fused block-diagonal weights)
# ----------------------------------------------------------------------------
def pack_params(params, use_bf16=True):
    """params holds per-layer (in,out) weights cw*/aw* and 1-D biases cb*/ab*."""
    wdt = jnp.bfloat16 if use_bf16 else jnp.float32

    def block_diag(wc, wa):
        ic, oc = wc.shape
        ia, oa = wa.shape
        w = jnp.zeros((ic + ia, oc + oa), jnp.float32)
        w = w.at[:ic, :oc].set(wc)
        w = w.at[ic:, oc:].set(wa)
        return w

    w0 = jnp.concatenate([params["cw0"], params["aw0"]], axis=1)   # (F, 192)
    w1 = block_diag(params["cw1"], params["aw1"])                  # (192, 256)
    w2 = block_diag(params["cw2"], params["aw2"])                  # (256, 192)
    w3 = block_diag(params["cw3"], params["aw3"])                  # (192, 2)

    b0 = jnp.concatenate([params["cb0"], params["ab0"]])[None, :]
    b1 = jnp.concatenate([params["cb1"], params["ab1"]])[None, :]
    b2 = jnp.concatenate([params["cb2"], params["ab2"]])[None, :]
    b3 = jnp.concatenate([params["cb3"], params["ab3"]])[None, :]

    weights = [w.astype(wdt) for w in (w0, w1, w2, w3)]
    # Hidden-layer biases in the compute dtype (bf16 epilogue); head bias f32.
    biases = [b0.astype(wdt), b1.astype(wdt), b2.astype(wdt),
              b3.astype(jnp.float32)]
    return weights, biases


# ----------------------------------------------------------------------------
# Wrapper
# ----------------------------------------------------------------------------
def actor_critic_forward(state, params, price_min, price_max,
                         *, tile_b=2048, use_bf16=True):
    """Fused ActorCritic forward. Returns (value (B,1), policy_mean (B,1))."""
    B, F = state.shape
    price_delta = float(price_max) - float(price_min)

    weights, biases = pack_params(params, use_bf16=use_bf16)

    # Input in the matmul dtype: halves the only meaningful HBM read when bf16.
    in_dt = jnp.bfloat16 if use_bf16 else jnp.float32
    state = state.astype(in_dt)

    # Tile selection: multiple of 16 (bf16 sublane packing; also valid for f32),
    # no bigger than needed for the batch, hard-capped at 8192.
    SUB = 16
    tile = max(SUB, min(_round_up(tile_b, SUB), _round_up(B, SUB), 8192))
    # For batches spanning several tiles-worth of rows, cap the tile so the
    # grid has >= 2 steps (v7x megacore) and batch-padding waste stays small.
    if B >= 4 * SUB:
        tile = min(tile, _round_up((B + 3) // 4, SUB))

    B_pad = _round_up(B, tile)
    if B_pad != B:
        state = jnp.pad(state, ((0, B_pad - B), (0, 0)))
    grid = (B_pad // tile,)

    kernel = functools.partial(
        _actor_critic_kernel,
        price_min=float(price_min),
        price_delta=price_delta,
    )

    # state: tiled over batch; params: constant index map -> DMA'd once, resident.
    # (Constant blocks would also accept pipeline_mode=pl.Buffered(1); skipped —
    #  the VMEM saving is negligible here and double-buffering them is harmless.)
    in_specs = [pl.BlockSpec((tile, F), lambda i: (i, 0))]
    flat_params = []
    for w, b in zip(weights, biases):
        in_specs.append(pl.BlockSpec(w.shape, lambda i: (0, 0)))
        in_specs.append(pl.BlockSpec(b.shape, lambda i: (0, 0)))
        flat_params.extend([w, b])

    out = pl.pallas_call(
        kernel,
        out_shape=jax.ShapeDtypeStruct((B_pad, 2), jnp.float32),
        grid=grid,
        in_specs=in_specs,
        out_specs=pl.BlockSpec((tile, 2), lambda i: (i, 0)),
        compiler_params=pltpu.CompilerParams(
            dimension_semantics=("parallel",),
            # Explicit scoped-VMEM budget: above v5e's 16 MiB / v6e-v7x's 32 MiB
            # defaults, comfortably under v7x's 64 MiB physical per TC.
            vmem_limit_bytes=48 * 1024 * 1024,
        ),
    )(state, *flat_params)

    value = out[:B, 0:1]
    policy_mean = out[:B, 1:2]
    return value, policy_mean


# ----------------------------------------------------------------------------
# Pure-JAX reference (mirrors the PyTorch module, all f32)
# ----------------------------------------------------------------------------
def actor_critic_reference(state, params, price_min, price_max):
    x = state.astype(jnp.float32)

    def mlp(x, pre):
        h = x
        for i in range(4):
            h = h @ params[f"{pre}w{i}"] + params[f"{pre}b{i}"]
            if i < 3:
                h = jax.nn.relu(h)
        return h

    value = mlp(x, "c")
    raw = mlp(x, "a")
    policy = (jax.nn.sigmoid(raw * 0.001)
              * (float(price_max) - float(price_min)) + float(price_min))
    return value, policy


# ----------------------------------------------------------------------------
# Initialization (matches the PyTorch module's init scheme)
# ----------------------------------------------------------------------------
def _xavier_uniform(key, fan_in, fan_out):
    bound = (6.0 / (fan_in + fan_out)) ** 0.5
    # stored as (in, out) so the kernel does x @ W
    return jax.random.uniform(
        key, (fan_in, fan_out), jnp.float32, minval=-bound, maxval=bound
    )


def _default_linear(key, fan_in, fan_out):
    # PyTorch nn.Linear default: U(-1/sqrt(fan_in), 1/sqrt(fan_in)) for W and b
    kw, kb = jax.random.split(key)
    bound = 1.0 / (fan_in ** 0.5)
    w = jax.random.uniform(
        kw, (fan_in, fan_out), jnp.float32, minval=-bound, maxval=bound
    )
    b = jax.random.uniform(
        kb, (fan_out,), jnp.float32, minval=-bound, maxval=bound
    )
    return w, b


def init_params(key, num_state_features):
    keys = jax.random.split(key, 8)
    params = {}

    # critic: default PyTorch Linear init  (F -> 64 -> 128 -> 64 -> 1)
    critic_dims = [(num_state_features, 64), (64, 128), (128, 64), (64, 1)]
    for i, (fi, fo) in enumerate(critic_dims):
        w, b = _default_linear(keys[i], fi, fo)
        params[f"cw{i}"] = w
        params[f"cb{i}"] = b

    # actor: xavier_uniform_ weights, bias = 0.01  (F -> 128 -> 128 -> 128 -> 1)
    actor_dims = [(num_state_features, 128), (128, 128), (128, 128), (128, 1)]
    for i, (fi, fo) in enumerate(actor_dims):
        params[f"aw{i}"] = _xavier_uniform(keys[4 + i], fi, fo)
        params[f"ab{i}"] = jnp.full((fo,), 0.01, jnp.float32)

    return params


if __name__ == "__main__":
    num_state_features = 32
    batch = 2
    price_min = 10.0
    price_max = 50.0

    key = jax.random.PRNGKey(0)
    k_params, k_state = jax.random.split(key)

    params = init_params(k_params, num_state_features)
    state = jax.random.normal(k_state, (batch, num_state_features), jnp.float32)

    # Pure-JAX reference.
    v_ref, p_ref = actor_critic_reference(state, params, price_min, price_max)

    # Parity path (all f32).
    v32, p32 = actor_critic_forward(
        state, params, price_min, price_max, use_bf16=False
    )
    jax.block_until_ready((v32, p32))
    assert v32.shape == (batch, 1) and p32.shape == (batch, 1)
    assert bool(jnp.allclose(v32, v_ref, atol=5e-2, rtol=5e-2))
    assert bool(jnp.allclose(p32, p_ref, atol=5e-2, rtol=5e-2))

    # Default fast path (bf16 weights / input / epilogue).
    value, policy_mean = actor_critic_forward(
        state, params, price_min, price_max
    )
    jax.block_until_ready((value, policy_mean))

    assert value.shape == (batch, 1)
    assert policy_mean.shape == (batch, 1)
    # policy_mean must lie in [price_min, price_max]
    assert bool(jnp.all(policy_mean >= price_min)) and bool(
        jnp.all(policy_mean <= price_max)
    )
    # bf16 path tracks the f32 reference within quantization tolerance
    assert bool(jnp.allclose(value, v_ref, atol=0.25, rtol=0.1))
    assert bool(jnp.allclose(policy_mean, p_ref, atol=0.25, rtol=0.1))

    print("KERNEL_OK")
</pallas_src>

<mosaic_0001>
module attributes {stable_mosaic.version = 11 : i64} {
  func.func @_actor_critic_kernel(%arg0: i32, %arg1: memref<16x32xf32, #tpu.memory_space<vmem>>, %arg2: memref<32x192xf32, #tpu.memory_space<vmem>>, %arg3: memref<1x192xf32, #tpu.memory_space<vmem>>, %arg4: memref<192x256xf32, #tpu.memory_space<vmem>>, %arg5: memref<1x256xf32, #tpu.memory_space<vmem>>, %arg6: memref<256x192xf32, #tpu.memory_space<vmem>>, %arg7: memref<1x192xf32, #tpu.memory_space<vmem>>, %arg8: memref<192x2xf32, #tpu.memory_space<vmem>>, %arg9: memref<1x2xf32, #tpu.memory_space<vmem>>, %arg10: memref<16x2xf32, #tpu.memory_space<vmem>>) attributes {dimension_semantics = [#tpu.dimension_semantics<parallel>], iteration_bounds = array<i64: 1>, scalar_prefetch = 0 : i64, scratch_operands = 0 : i64, tpu.core_type = #tpu.core_type<tc>, window_params = [{transform_indices = @transform_0, window_bounds = array<i64: 16, 32>}, {pipeline_mode = #tpu.pipeline_mode<synchronous>, transform_indices = @transform_1, window_bounds = array<i64: 32, 192>}, {pipeline_mode = #tpu.pipeline_mode<synchronous>, transform_indices = @transform_2, window_bounds = array<i64: 1, 192>}, {pipeline_mode = #tpu.pipeline_mode<synchronous>, transform_indices = @transform_3, window_bounds = array<i64: 192, 256>}, {pipeline_mode = #tpu.pipeline_mode<synchronous>, transform_indices = @transform_4, window_bounds = array<i64: 1, 256>}, {pipeline_mode = #tpu.pipeline_mode<synchronous>, transform_indices = @transform_5, window_bounds = array<i64: 256, 192>}, {pipeline_mode = #tpu.pipeline_mode<synchronous>, transform_indices = @transform_6, window_bounds = array<i64: 1, 192>}, {pipeline_mode = #tpu.pipeline_mode<synchronous>, transform_indices = @transform_7, window_bounds = array<i64: 192, 2>}, {pipeline_mode = #tpu.pipeline_mode<synchronous>, transform_indices = @transform_8, window_bounds = array<i64: 1, 2>}, {transform_indices = @transform_9, window_bounds = array<i64: 16, 2>}]} {
    %c0 = arith.constant 0 : index
    %c0_0 = arith.constant 0 : index
    %0 = vector.load %arg1[%c0, %c0_0] : memref<16x32xf32, #tpu.memory_space<vmem>>, vector<16x32xf32>
    %c0_1 = arith.constant 0 : index
    %c0_2 = arith.constant 0 : index
    %1 = vector.load %arg2[%c0_1, %c0_2] : memref<32x192xf32, #tpu.memory_space<vmem>>, vector<32x192xf32>
    %cst = arith.constant dense<0.000000e+00> : vector<16x192xf32>
    %2 = tpu.matmul %0, %1, %cst {dimension_numbers = #tpu.dot_dimension_numbers<[1], [0], [0], [1], [0, 0, 1, 1], [], []>} : vector<16x32xf32>, vector<32x192xf32>, vector<16x192xf32> -> vector<16x192xf32>
    %c0_3 = arith.constant 0 : index
    %c0_4 = arith.constant 0 : index
    %3 = vector.load %arg3[%c0_3, %c0_4] : memref<1x192xf32, #tpu.memory_space<vmem>>, vector<1x192xf32>
    %4 = vector.broadcast %3 : vector<1x192xf32> to vector<16x192xf32>
    %5 = arith.addf %2, %4 : vector<16x192xf32>
    %cst_5 = arith.constant 0.000000e+00 : f32
    %6 = vector.broadcast %cst_5 : f32 to vector<16x192xf32>
    %7 = arith.maximumf %5, %6 : vector<16x192xf32>
    %c0_6 = arith.constant 0 : index
    %c0_7 = arith.constant 0 : index
    %8 = vector.load %arg4[%c0_6, %c0_7] : memref<192x256xf32, #tpu.memory_space<vmem>>, vector<192x256xf32>
    %cst_8 = arith.constant dense<0.000000e+00> : vector<16x256xf32>
    %9 = tpu.matmul %7, %8, %cst_8 {dimension_numbers = #tpu.dot_dimension_numbers<[1], [0], [0], [1], [0, 0, 1, 1], [], []>} : vector<16x192xf32>, vector<192x256xf32>, vector<16x256xf32> -> vector<16x256xf32>
    %c0_9 = arith.constant 0 : index
    %c0_10 = arith.constant 0 : index
    %10 = vector.load %arg5[%c0_9, %c0_10] : memref<1x256xf32, #tpu.memory_space<vmem>>, vector<1x256xf32>
    %11 = vector.broadcast %10 : vector<1x256xf32> to vector<16x256xf32>
    %12 = arith.addf %9, %11 : vector<16x256xf32>
    %cst_11 = arith.constant 0.000000e+00 : f32
    %13 = vector.broadcast %cst_11 : f32 to vector<16x256xf32>
    %14 = arith.maximumf %12, %13 : vector<16x256xf32>
    %c0_12 = arith.constant 0 : index
    %c0_13 = arith.constant 0 : index
    %15 = vector.load %arg6[%c0_12, %c0_13] : memref<256x192xf32, #tpu.memory_space<vmem>>, vector<256x192xf32>
    %cst_14 = arith.constant dense<0.000000e+00> : vector<16x192xf32>
    %16 = tpu.matmul %14, %15, %cst_14 {dimension_numbers = #tpu.dot_dimension_numbers<[1], [0], [0], [1], [0, 0, 1, 1], [], []>} : vector<16x256xf32>, vector<256x192xf32>, vector<16x192xf32> -> vector<16x192xf32>
    %c0_15 = arith.constant 0 : index
    %c0_16 = arith.constant 0 : index
    %17 = vector.load %arg7[%c0_15, %c0_16] : memref<1x192xf32, #tpu.memory_space<vmem>>, vector<1x192xf32>
    %18 = vector.broadcast %17 : vector<1x192xf32> to vector<16x192xf32>
    %19 = arith.addf %16, %18 : vector<16x192xf32>
    %cst_17 = arith.constant 0.000000e+00 : f32
    %20 = vector.broadcast %cst_17 : f32 to vector<16x192xf32>
    %21 = arith.maximumf %19, %20 : vector<16x192xf32>
    %c0_18 = arith.constant 0 : index
    %c0_19 = arith.constant 0 : index
    %22 = vector.load %arg8[%c0_18, %c0_19] : memref<192x2xf32, #tpu.memory_space<vmem>>, vector<192x2xf32>
    %cst_20 = arith.constant dense<0.000000e+00> : vector<16x2xf32>
    %23 = tpu.matmul %21, %22, %cst_20 {dimension_numbers = #tpu.dot_dimension_numbers<[1], [0], [0], [1], [0, 0, 1, 1], [], []>} : vector<16x192xf32>, vector<192x2xf32>, vector<16x2xf32> -> vector<16x2xf32>
    %c0_21 = arith.constant 0 : index
    %c0_22 = arith.constant 0 : index
    %24 = vector.load %arg9[%c0_21, %c0_22] : memref<1x2xf32, #tpu.memory_space<vmem>>, vector<1x2xf32>
    %25 = vector.broadcast %24 : vector<1x2xf32> to vector<16x2xf32>
    %26 = arith.addf %23, %25 : vector<16x2xf32>
    %27 = vector.extract_strided_slice %26 {offsets = [0, 0], sizes = [16, 1], strides = [1, 1]} : vector<16x2xf32> to vector<16x1xf32>
    %c0_23 = arith.constant 0 : index
    %c0_24 = arith.constant 0 : index
    %28 = vector.load %arg10[%c0_23, %c0_24] : memref<16x2xf32, #tpu.memory_space<vmem>>, vector<16x1xf32>
    tpu.vector_store %arg10[%c0_23, %c0_24], %27 {strides = array<i32>} : memref<16x2xf32, #tpu.memory_space<vmem>>, vector<16x1xf32>,
    %29 = vector.extract_strided_slice %26 {offsets = [0, 1], sizes = [16, 1], strides = [1, 1]} : vector<16x2xf32> to vector<16x1xf32>
    %cst_25 = arith.constant 1.000000e-03 : f32
    %30 = vector.broadcast %cst_25 : f32 to vector<16x1xf32>
    %31 = arith.mulf %29, %30 : vector<16x1xf32>
    %32 = arith.negf %31 : vector<16x1xf32>
    %33 = math.exp %32 : vector<16x1xf32>
    %cst_26 = arith.constant 1.000000e+00 : f32
    %34 = vector.broadcast %cst_26 : f32 to vector<16x1xf32>
    %35 = arith.addf %34, %33 : vector<16x1xf32>
    %36 = arith.divf %34, %35 : vector<16x1xf32>
    %cst_27 = arith.constant 4.000000e+01 : f32
    %37 = vector.broadcast %cst_27 : f32 to vector<16x1xf32>
    %38 = arith.mulf %36, %37 : vector<16x1xf32>
    %cst_28 = arith.constant 1.000000e+01 : f32
    %39 = vector.broadcast %cst_28 : f32 to vector<16x1xf32>
    %40 = arith.addf %38, %39 : vector<16x1xf32>
    %c0_29 = arith.constant 0 : index
    %c1 = arith.constant 1 : index
    %41 = vector.load %arg10[%c0_29, %c1] : memref<16x2xf32, #tpu.memory_space<vmem>>, vector<16x1xf32>
    tpu.vector_store %arg10[%c0_29, %c1], %40 {strides = array<i32>} : memref<16x2xf32, #tpu.memory_space<vmem>>, vector<16x1xf32>,
    return
  }
  func.func @transform_0(%arg0: i32) -> (i32, i32) {
    %c0_i32 = arith.constant 0 : i32
    %c0_i32_0 = arith.constant 0 : i32
    return %arg0, %c0_i32 : i32, i32
  }
  func.func @transform_1(%arg0: i32) -> (i32, i32) {
    %c0_i32 = arith.constant 0 : i32
    %c0_i32_0 = arith.constant 0 : i32
    %c0_i32_1 = arith.constant 0 : i32
    return %c0_i32, %c0_i32_0 : i32, i32
  }
  func.func @transform_2(%arg0: i32) -> (i32, i32) {
    %c0_i32 = arith.constant 0 : i32
    %c0_i32_0 = arith.constant 0 : i32
    %c0_i32_1 = arith.constant 0 : i32
    return %c0_i32, %c0_i32_0 : i32, i32
  }
  func.func @transform_3(%arg0: i32) -> (i32, i32) {
    %c0_i32 = arith.constant 0 : i32
    %c0_i32_0 = arith.constant 0 : i32
    %c0_i32_1 = arith.constant 0 : i32
    return %c0_i32, %c0_i32_0 : i32, i32
  }
  func.func @transform_4(%arg0: i32) -> (i32, i32) {
    %c0_i32 = arith.constant 0 : i32
    %c0_i32_0 = arith.constant 0 : i32
    %c0_i32_1 = arith.constant 0 : i32
    return %c0_i32, %c0_i32_0 : i32, i32
  }
  func.func @transform_5(%arg0: i32) -> (i32, i32) {
    %c0_i32 = arith.constant 0 : i32
    %c0_i32_0 = arith.constant 0 : i32
    %c0_i32_1 = arith.constant 0 : i32
    return %c0_i32, %c0_i32_0 : i32, i32
  }
  func.func @transform_6(%arg0: i32) -> (i32, i32) {
    %c0_i32 = arith.constant 0 : i32
    %c0_i32_0 = arith.constant 0 : i32
    %c0_i32_1 = arith.constant 0 : i32
    return %c0_i32, %c0_i32_0 : i32, i32
  }
  func.func @transform_7(%arg0: i32) -> (i32, i32) {
    %c0_i32 = arith.constant 0 : i32
    %c0_i32_0 = arith.constant 0 : i32
    %c0_i32_1 = arith.constant 0 : i32
    return %c0_i32, %c0_i32_0 : i32, i32
  }
  func.func @transform_8(%arg0: i32) -> (i32, i32) {
    %c0_i32 = arith.constant 0 : i32
    %c0_i32_0 = arith.constant 0 : i32
    %c0_i32_1 = arith.constant 0 : i32
    return %c0_i32, %c0_i32_0 : i32, i32
  }
  func.func @transform_9(%arg0: i32) -> (i32, i32) {
    %c0_i32 = arith.constant 0 : i32
    %c0_i32_0 = arith.constant 0 : i32
    return %arg0, %c0_i32 : i32, i32
  }
}

</mosaic_0001>

<llo_original>
// kernel: tpu_custom_call.1
$region0: #{tpu_custom_call.1}
  #allocation0 [shape = 'u32[]', space=smem, size = 0x4, offset = 0x4, fixed_abs, tag = 'smem constant byte address 0x4 - core index']
  #allocation1 [shape = 'u32[144,128]{1,0:T(1,128)}', space=vmem, size = 0x12000, scoped, tag = 'internal scratch']
  %s0 = inlined_call_operand.vmem [shape: f32[16,32], index: 0, kind: input, shape index: {}]
  %s1 = inlined_call_operand.vmem [shape: f32[32,192], index: 1, kind: input, shape index: {}]
  %s2 = inlined_call_operand.vmem [shape: f32[1,192], index: 2, kind: input, shape index: {}]
  %s3 = inlined_call_operand.vmem [shape: f32[192,256], index: 3, kind: input, shape index: {}]
  %s4 = inlined_call_operand.vmem [shape: f32[1,256], index: 4, kind: input, shape index: {}]
  %s5 = inlined_call_operand.vmem [shape: f32[256,192], index: 5, kind: input, shape index: {}]
  %s6 = inlined_call_operand.vmem [shape: f32[1,192], index: 6, kind: input, shape index: {}]
  %s7 = inlined_call_operand.vmem [shape: f32[192,2], index: 7, kind: input, shape index: {}]
  %s8 = inlined_call_operand.vmem [shape: f32[1,2], index: 8, kind: input, shape index: {}]
  %s9 = inlined_call_operand.vmem [shape: f32[16,2], index: 9, kind: output, shape index: {}]
  %s10 = sld [smem:[#allocation0]]
  $region46: #{tpu_custom_call.1} parent=0
    _
  %s12 = ssub.s32 1, %s10
  %s13 = scalar_select 0, %s12, %s10
  // Predicated region
  $region2: #{tpu_custom_call.1} parent=0 // pred_check
    _
  $region3: #{tpu_custom_call.1} parent=0 // pred_check_branch
    %15 = sbr.rel (0) target = $region5
  $region4: #{tpu_custom_call.1} parent=0 // pred_region
    _
  $region5: #{tpu_custom_call.1} parent=0 // pred_fallthru
    _
  // Predicated region
  $region6: #{tpu_custom_call.1} parent=0 // pred_check
    _
  $region7: #{tpu_custom_call.1} parent=0 // pred_check_branch
    %17 = sbr.rel (0) target = $region9
  $region8: #{tpu_custom_call.1} parent=0 // pred_region
    _
  $region9: #{tpu_custom_call.1} parent=0 // pred_fallthru
    _
  // Predicated region
  $region10: #{tpu_custom_call.1} parent=0 // pred_check
    _
  $region11: #{tpu_custom_call.1} parent=0 // pred_check_branch
    %19 = sbr.rel (0) target = $region13
  $region12: #{tpu_custom_call.1} parent=0 // pred_region
    _
  $region13: #{tpu_custom_call.1} parent=0 // pred_fallthru
    _
  // Predicated region
  $region14: #{tpu_custom_call.1} parent=0 // pred_check
    _
  $region15: #{tpu_custom_call.1} parent=0 // pred_check_branch
    %21 = sbr.rel (0) target = $region17
  $region16: #{tpu_custom_call.1} parent=0 // pred_region
    _
  $region17: #{tpu_custom_call.1} parent=0 // pred_fallthru
    _
  // Predicated region
  $region18: #{tpu_custom_call.1} parent=0 // pred_check
    _
  $region19: #{tpu_custom_call.1} parent=0 // pred_check_branch
    %23 = sbr.rel (0) target = $region21
  $region20: #{tpu_custom_call.1} parent=0 // pred_region
    _
  $region21: #{tpu_custom_call.1} parent=0 // pred_fallthru
    _
  // Predicated region
  $region22: #{tpu_custom_call.1} parent=0 // pred_check
    _
  $region23: #{tpu_custom_call.1} parent=0 // pred_check_branch
    %25 = sbr.rel (0) target = $region25
  $region24: #{tpu_custom_call.1} parent=0 // pred_region
    _
  $region25: #{tpu_custom_call.1} parent=0 // pred_fallthru
    _
  // Predicated region
  $region26: #{tpu_custom_call.1} parent=0 // pred_check
    _
  $region27: #{tpu_custom_call.1} parent=0 // pred_check_branch
    %27 = sbr.rel (0) target = $region29
  $region28: #{tpu_custom_call.1} parent=0 // pred_region
    _
  $region29: #{tpu_custom_call.1} parent=0 // pred_fallthru
    _
  // Predicated region
  $region30: #{tpu_custom_call.1} parent=0 // pred_check
    _
  $region31: #{tpu_custom_call.1} parent=0 // pred_check_branch
    %29 = sbr.rel (0) target = $region33
  $region32: #{tpu_custom_call.1} parent=0 // pred_region
    _
  $region33: #{tpu_custom_call.1} parent=0 // pred_fallthru
    _
  // Predicated region
  $region34: #{tpu_custom_call.1} parent=0 // pred_check
    _
  $region35: #{tpu_custom_call.1} parent=0 // pred_check_branch
    %31 = sbr.rel (0) target = $region37
  $region36: #{tpu_custom_call.1} parent=0 // pred_region
    _
  $region37: #{tpu_custom_call.1} parent=0 // pred_fallthru
    _
  %v32 = vld [vmem:[%s0] sm:$0xff]
  %v33 = vld [vmem:[%s0 + $0x8] sm:$0xff]
  %v34 = vld [vmem:[%s1] sm:$0xff]
  %v35 = vld [vmem:[%s1 + $0x8] sm:$0xff]
  %v36 = vld [vmem:[%s1 + $0x10] sm:$0xff]
  %v37 = vld [vmem:[%s1 + $0x18] sm:$0xff]
  %v38 = vld [vmem:[%s1 + $0x20] sm:$0xff]
  %v39 = vld [vmem:[%s1 + $0x28] sm:$0xff]
  %v40 = vld [vmem:[%s1 + $0x30] sm:$0xff]
  %v41 = vld [vmem:[%s1 + $0x38] sm:$0xff]
  %v42 = vld [vmem:[%s2] sm:$0x3]
  %v44 = vlaneseq
  %v45 = vshrl.u32 %v44, 7
  %v46 = vsub.s32 0, %v45
  %v47 = vrot.slane %v42, %v46
  %v48 = vlaneseq
  %v49 = vshrl.u32 %v48, 7
  %v50 = vsub.s32 1, %v49
  %v51 = vrot.slane %v42, %v50
  %vm54 = vcmask 261120
  %v56 = vsel %vm54, %v32, 0
  %v59 = vsel %vm54, %v33, 0
  %61 = vmatprep.subr.mxu0 0.0
  %62 = vmatpush1.msra.mxu0 0.0
  %63 = vmatprep.subr.mxu0 0.0
  %64 = vmatpush1.msra.mxu0 0.0
  %65 = vmatprep.subr.mxu0 0.0
  %66 = vmatpush1.msra.mxu0 0.0
  %67 = vmatprep.subr.mxu0 0.0
  %68 = vmatpush1.msra.mxu0 0.0
  %69 = vmatprep.subr.mxu0 0.0
  %70 = vmatpush1.msra.mxu0 0.0
  %71 = vmatprep.subr.mxu0 0.0
  %72 = vmatpush1.msra.mxu0 0.0
  %73 = vmatprep.subr.mxu0 0.0
  %74 = vmatpush1.msra.mxu0 0.0
  %75 = vmatprep.subr.mxu0 0.0
  %76 = vmatpush1.msra.mxu0 0.0
  %77 = vmatprep.subr.mxu0 0.0
  %78 = vmatpush1.msra.mxu0 0.0
  %79 = vmatprep.subr.mxu0 0.0
  %80 = vmatpush1.msra.mxu0 0.0
  %81 = vmatprep.subr.mxu0 0.0
  %82 = vmatpush1.msra.mxu0 0.0
  %83 = vmatprep.subr.mxu0 0.0
  %84 = vmatpush1.msra.mxu0 0.0
  %85 = vmatprep.subr.mxu0 %v41
  %86 = vmatpush1.msra.mxu0 %v40
  %87 = vmatprep.subr.mxu0 %v39
  %88 = vmatpush1.msra.mxu0 %v38
  %89 = vmatprep.subr.mxu0 %v37
  %90 = vmatpush1.msra.mxu0 %v36
  %91 = vmatprep.subr.mxu0 %v35
  %92 = vmatpush1.msra.mxu0 %v34
  %93 = vmatprep.subr.mxu0 0.0
  %94 = vmatpush2.msra.mxu0 0.0
  %95 = vmatprep.subr.mxu0 0.0
  %96 = vmatpush2.msra.mxu0 0.0
  %97 = vmatprep.subr.mxu0 0.0
  %98 = vmatpush2.msra.mxu0 0.0
  %99 = vmatprep.subr.mxu0 0.0
  %100 = vmatpush2.msra.mxu0 0.0
  %101 = vmatprep.subr.mxu0 0.0
  %102 = vmatpush2.msra.mxu0 0.0
  %103 = vmatprep.subr.mxu0 0.0
  %104 = vmatpush2.msra.mxu0 0.0
  %105 = vmatprep.subr.mxu0 0.0
  %106 = vmatpush2.msra.mxu0 0.0
  %107 = vmatprep.subr.mxu0 0.0
  %108 = vmatpush2.msra.mxu0 0.0
  %109 = vmatprep.subr.mxu0 0.0
  %110 = vmatpush2.msra.mxu0 0.0
  %111 = vmatprep.subr.mxu0 0.0
  %112 = vmatpush2.msra.mxu0 0.0
  %113 = vmatprep.subr.mxu0 0.0
  %114 = vmatpush2.msra.mxu0 0.0
  %115 = vmatprep.subr.mxu0 0.0
  %116 = vmatpush2.msra.mxu0 0.0
  %117 = vmatprep.subr.mxu0 0.0
  %118 = vmatpush2.msra.mxu0 0.0
  %119 = vmatprep.subr.mxu0 0.0
  %120 = vmatpush2.msra.mxu0 0.0
  %121 = vmatprep.subr.mxu0 0.0
  %122 = vmatpush2.msra.mxu0 0.0
  %123 = vmatprep.subr.mxu0 0.0
  %124 = vmatpush2.msra.mxu0 0.0
  %125 = vmatprep.mubr.f32.mxu0 0.0
  %126 = vmatmul.mubr.f32.gmra.mxu0 %v56
  %v127 = vpop.f32.mrf.mxu0
  %v128 = vadd.f32 %v47, %v127
  %v129 = vpop.f32.mrf.mxu0
  %v130 = vadd.f32 %v51, %v129
  %131 = vmatprep.mubr.f32.mxu0 0.0
  %132 = vmatmul.mubr.f32.gmra.mxu0 %v59
  %v133 = vpop.f32.mrf.mxu0
  %v134 = vadd.f32 %v47, %v133
  %v135 = vpop.f32.mrf.mxu0
  %v136 = vadd.f32 %v51, %v135
  %137 = vdwg.mxu0
  %v138 = vmax.f32 %v128, 0.0
  %v139 = vmax.f32 %v130, 0.0
  %v140 = vmax.f32 %v134, 0.0
  %v141 = vmax.f32 %v136, 0.0
  %v142 = vld [vmem:[%s3] sm:$0xff]
  %v143 = vld [vmem:[%s3 + $0x8] sm:$0xff]
  %v144 = vld [vmem:[%s3 + $0x10] sm:$0xff]
  %v145 = vld [vmem:[%s3 + $0x18] sm:$0xff]
  %v146 = vld [vmem:[%s3 + $0x20] sm:$0xff]
  %v147 = vld [vmem:[%s3 + $0x28] sm:$0xff]
  %v148 = vld [vmem:[%s3 + $0x30] sm:$0xff]
  %v149 = vld [vmem:[%s3 + $0x38] sm:$0xff]
  %v150 = vld [vmem:[%s3 + $0x40] sm:$0xff]
  %v151 = vld [vmem:[%s3 + $0x48] sm:$0xff]
  %v152 = vld [vmem:[%s3 + $0x50] sm:$0xff]
  %v153 = vld [vmem:[%s3 + $0x58] sm:$0xff]
  %v154 = vld [vmem:[%s3 + $0x60] sm:$0xff]
  %v155 = vld [vmem:[%s3 + $0x68] sm:$0xff]
  %v156 = vld [vmem:[%s3 + $0x70] sm:$0xff]
  %v157 = vld [vmem:[%s3 + $0x78] sm:$0xff]
  %v158 = vld [vmem:[%s3 + $0x80] sm:$0xff]
  %v159 = vld [vmem:[%s3 + $0x88] sm:$0xff]
  %v160 = vld [vmem:[%s3 + $0x90] sm:$0xff]
  %v161 = vld [vmem:[%s3 + $0x98] sm:$0xff]
  %v162 = vld [vmem:[%s3 + $0xa0] sm:$0xff]
  %v163 = vld [vmem:[%s3 + $0xa8] sm:$0xff]
  %v164 = vld [vmem:[%s3 + $0xb0] sm:$0xff]
  %v165 = vld [vmem:[%s3 + $0xb8] sm:$0xff]
  %v166 = vld [vmem:[%s3 + $0xc0] sm:$0xff]
  %v167 = vld [vmem:[%s3 + $0xc8] sm:$0xff]
  %v168 = vld [vmem:[%s3 + $0xd0] sm:$0xff]
  %v169 = vld [vmem:[%s3 + $0xd8] sm:$0xff]
  %v170 = vld [vmem:[%s3 + $0xe0] sm:$0xff]
  %v171 = vld [vmem:[%s3 + $0xe8] sm:$0xff]
  %v172 = vld [vmem:[%s3 + $0xf0] sm:$0xff]
  %v173 = vld [vmem:[%s3 + $0xf8] sm:$0xff]
  %v174 = vld [vmem:[%s3 + $0x100] sm:$0xff]
  %v175 = vld [vmem:[%s3 + $0x108] sm:$0xff]
  %v176 = vld [vmem:[%s3 + $0x110] sm:$0xff]
  %v177 = vld [vmem:[%s3 + $0x118] sm:$0xff]
  %v178 = vld [vmem:[%s3 + $0x120] sm:$0xff]
  %v179 = vld [vmem:[%s3 + $0x128] sm:$0xff]
  %v180 = vld [vmem:[%s3 + $0x130] sm:$0xff]
  %v181 = vld [vmem:[%s3 + $0x138] sm:$0xff]
  %v182 = vld [vmem:[%s3 + $0x140] sm:$0xff]
  %v183 = vld [vmem:[%s3 + $0x148] sm:$0xff]
  %v184 = vld [vmem:[%s3 + $0x150] sm:$0xff]
  %v185 = vld [vmem:[%s3 + $0x158] sm:$0xff]
  %v186 = vld [vmem:[%s3 + $0x160] sm:$0xff]
  %v187 = vld [vmem:[%s3 + $0x168] sm:$0xff]
  %v188 = vld [vmem:[%s3 + $0x170] sm:$0xff]
  %v189 = vld [vmem:[%s3 + $0x178] sm:$0xff]
  %v190 = vld [vmem:[%s4] sm:$0x3]
  %v192 = vlaneseq
  %v193 = vshrl.u32 %v192, 7
  %v194 = vsub.s32 0, %v193
  %v195 = vrot.slane %v190, %v194
  %v196 = vlaneseq
  %v197 = vshrl.u32 %v196, 7
  %v198 = vsub.s32 1, %v197
  %v199 = vrot.slane %v190, %v198
  %vm202 = vcmask 523264
  %v204 = vsel %vm202, %v139, 0
  %v207 = vsel %vm202, %v141, 0
  %209 = vmatprep.subr.mxu0 %v173
  %210 = vmatpush1.msra.mxu0 %v172
  %211 = vmatprep.subr.mxu0 %v171
  %212 = vmatpush1.msra.mxu0 %v170
  %213 = vmatprep.subr.mxu0 %v169
  %214 = vmatpush1.msra.mxu0 %v168
  %215 = vmatprep.subr.mxu0 %v167
  %216 = vmatpush1.msra.mxu0 %v166
  %217 = vmatprep.subr.mxu0 %v165
  %218 = vmatpush1.msra.mxu0 %v164
  %219 = vmatprep.subr.mxu0 %v163
  %220 = vmatpush1.msra.mxu0 %v162
  %221 = vmatprep.subr.mxu0 %v161
  %222 = vmatpush1.msra.mxu0 %v160
  %223 = vmatprep.subr.mxu0 %v159
  %224 = vmatpush1.msra.mxu0 %v158
  %225 = vmatprep.subr.mxu0 %v157
  %226 = vmatpush1.msra.mxu0 %v156
  %227 = vmatprep.subr.mxu0 %v155
  %228 = vmatpush1.msra.mxu0 %v154
  %229 = vmatprep.subr.mxu0 %v153
  %230 = vmatpush1.msra.mxu0 %v152
  %231 = vmatprep.subr.mxu0 %v151
  %232 = vmatpush1.msra.mxu0 %v150
  %233 = vmatprep.subr.mxu0 %v149
  %234 = vmatpush1.msra.mxu0 %v148
  %235 = vmatprep.subr.mxu0 %v147
  %236 = vmatpush1.msra.mxu0 %v146
  %237 = vmatprep.subr.mxu0 %v145
  %238 = vmatpush1.msra.mxu0 %v144
  %239 = vmatprep.subr.mxu0 %v143
  %240 = vmatpush1.msra.mxu0 %v142
  %241 = vmatprep.subr.mxu0 0.0
  %242 = vmatpush2.msra.mxu0 0.0
  %243 = vmatprep.subr.mxu0 0.0
  %244 = vmatpush2.msra.mxu0 0.0
  %245 = vmatprep.subr.mxu0 0.0
  %246 = vmatpush2.msra.mxu0 0.0
  %247 = vmatprep.subr.mxu0 0.0
  %248 = vmatpush2.msra.mxu0 0.0
  %249 = vmatprep.subr.mxu0 0.0
  %250 = vmatpush2.msra.mxu0 0.0
  %251 = vmatprep.subr.mxu0 0.0
  %252 = vmatpush2.msra.mxu0 0.0
  %253 = vmatprep.subr.mxu0 0.0
  %254 = vmatpush2.msra.mxu0 0.0
  %255 = vmatprep.subr.mxu0 0.0
  %256 = vmatpush2.msra.mxu0 0.0
  %257 = vmatprep.subr.mxu0 %v189
  %258 = vmatpush2.msra.mxu0 %v188
  %259 = vmatprep.subr.mxu0 %v187
  %260 = vmatpush2.msra.mxu0 %v186
  %261 = vmatprep.subr.mxu0 %v185
  %262 = vmatpush2.msra.mxu0 %v184
  %263 = vmatprep.subr.mxu0 %v183
  %264 = vmatpush2.msra.mxu0 %v182
  %265 = vmatprep.subr.mxu0 %v181
  %266 = vmatpush2.msra.mxu0 %v180
  %267 = vmatprep.subr.mxu0 %v179
  %268 = vmatpush2.msra.mxu0 %v178
  %269 = vmatprep.subr.mxu0 %v177
  %270 = vmatpush2.msra.mxu0 %v176
  %271 = vmatprep.subr.mxu0 %v175
  %272 = vmatpush2.msra.mxu0 %v174
  %273 = vmatprep.mubr.f32.mxu0 %v204
  %274 = vmatmul.mubr.f32.gmra.mxu0 %v138
  %v275 = vpop.f32.mrf.mxu0
  %v276 = vadd.f32 %v195, %v275
  %v277 = vpop.f32.mrf.mxu0
  %v278 = vadd.f32 %v199, %v277
  %279 = vmatprep.mubr.f32.mxu0 %v207
  %280 = vmatmul.mubr.f32.gmra.mxu0 %v140
  %v281 = vpop.f32.mrf.mxu0
  %v282 = vadd.f32 %v195, %v281
  %v283 = vpop.f32.mrf.mxu0
  %v284 = vadd.f32 %v199, %v283
  %285 = vdwg.mxu0
  %v286 = vmax.f32 %v276, 0.0
  %v287 = vmax.f32 %v278, 0.0
  %v288 = vmax.f32 %v282, 0.0
  %v289 = vmax.f32 %v284, 0.0
  %v290 = vld [vmem:[%s5] sm:$0xff]
  %v291 = vld [vmem:[%s5 + $0x8] sm:$0xff]
  %v292 = vld [vmem:[%s5 + $0x10] sm:$0xff]
  %v293 = vld [vmem:[%s5 + $0x18] sm:$0xff]
  %v294 = vld [vmem:[%s5 + $0x20] sm:$0xff]
  %v295 = vld [vmem:[%s5 + $0x28] sm:$0xff]
  %v296 = vld [vmem:[%s5 + $0x30] sm:$0xff]
  %v297 = vld [vmem:[%s5 + $0x38] sm:$0xff]
  %v298 = vld [vmem:[%s5 + $0x40] sm:$0xff]
  %v299 = vld [vmem:[%s5 + $0x48] sm:$0xff]
  %v300 = vld [vmem:[%s5 + $0x50] sm:$0xff]
  %v301 = vld [vmem:[%s5 + $0x58] sm:$0xff]
  %v302 = vld [vmem:[%s5 + $0x60] sm:$0xff]
  %v303 = vld [vmem:[%s5 + $0x68] sm:$0xff]
  %v304 = vld [vmem:[%s5 + $0x70] sm:$0xff]
  %v305 = vld [vmem:[%s5 + $0x78] sm:$0xff]
  %v306 = vld [vmem:[%s5 + $0x80] sm:$0xff]
  %v307 = vld [vmem:[%s5 + $0x88] sm:$0xff]
  %v308 = vld [vmem:[%s5 + $0x90] sm:$0xff]
  %v309 = vld [vmem:[%s5 + $0x98] sm:$0xff]
  %v310 = vld [vmem:[%s5 + $0xa0] sm:$0xff]
  %v311 = vld [vmem:[%s5 + $0xa8] sm:$0xff]
  %v312 = vld [vmem:[%s5 + $0xb0] sm:$0xff]
  %v313 = vld [vmem:[%s5 + $0xb8] sm:$0xff]
  %v314 = vld [vmem:[%s5 + $0xc0] sm:$0xff]
  %v315 = vld [vmem:[%s5 + $0xc8] sm:$0xff]
  %v316 = vld [vmem:[%s5 + $0xd0] sm:$0xff]
  %v317 = vld [vmem:[%s5 + $0xd8] sm:$0xff]
  %v318 = vld [vmem:[%s5 + $0xe0] sm:$0xff]
  %v319 = vld [vmem:[%s5 + $0xe8] sm:$0xff]
  %v320 = vld [vmem:[%s5 + $0xf0] sm:$0xff]
  %v321 = vld [vmem:[%s5 + $0xf8] sm:$0xff]
  %v322 = vld [vmem:[%s5 + $0x100] sm:$0xff]
  %v323 = vld [vmem:[%s5 + $0x108] sm:$0xff]
  %v324 = vld [vmem:[%s5 + $0x110] sm:$0xff]
  %v325 = vld [vmem:[%s5 + $0x118] sm:$0xff]
  %v326 = vld [vmem:[%s5 + $0x120] sm:$0xff]
  %v327 = vld [vmem:[%s5 + $0x128] sm:$0xff]
  %v328 = vld [vmem:[%s5 + $0x130] sm:$0xff]
  %v329 = vld [vmem:[%s5 + $0x138] sm:$0xff]
  %v330 = vld [vmem:[%s5 + $0x140] sm:$0xff]
  %v331 = vld [vmem:[%s5 + $0x148] sm:$0xff]
  %v332 = vld [vmem:[%s5 + $0x150] sm:$0xff]
  %v333 = vld [vmem:[%s5 + $0x158] sm:$0xff]
  %v334 = vld [vmem:[%s5 + $0x160] sm:$0xff]
  %v335 = vld [vmem:[%s5 + $0x168] sm:$0xff]
  %v336 = vld [vmem:[%s5 + $0x170] sm:$0xff]
  %v337 = vld [vmem:[%s5 + $0x178] sm:$0xff]
  %v338 = vld [vmem:[%s5 + $0x180] sm:$0xff]
  %v339 = vld [vmem:[%s5 + $0x188] sm:$0xff]
  %v340 = vld [vmem:[%s5 + $0x190] sm:$0xff]
  %v341 = vld [vmem:[%s5 + $0x198] sm:$0xff]
  %v342 = vld [vmem:[%s5 + $0x1a0] sm:$0xff]
  %v343 = vld [vmem:[%s5 + $0x1a8] sm:$0xff]
  %v344 = vld [vmem:[%s5 + $0x1b0] sm:$0xff]
  %v345 = vld [vmem:[%s5 + $0x1b8] sm:$0xff]
  %v346 = vld [vmem:[%s5 + $0x1c0] sm:$0xff]
  %v347 = vld [vmem:[%s5 + $0x1c8] sm:$0xff]
  %v348 = vld [vmem:[%s5 + $0x1d0] sm:$0xff]
  %v349 = vld [vmem:[%s5 + $0x1d8] sm:$0xff]
  %v350 = vld [vmem:[%s5 + $0x1e0] sm:$0xff]
  %v351 = vld [vmem:[%s5 + $0x1e8] sm:$0xff]
  %v352 = vld [vmem:[%s5 + $0x1f0] sm:$0xff]
  %v353 = vld [vmem:[%s5 + $0x1f8] sm:$0xff]
  %v354 = vld [vmem:[%s6] sm:$0x3]
  %v356 = vlaneseq
  %v357 = vshrl.u32 %v356, 7
  %v358 = vsub.s32 0, %v357
  %v359 = vrot.slane %v354, %v358
  %v360 = vlaneseq
  %v361 = vshrl.u32 %v360, 7
  %v362 = vsub.s32 1, %v361
  %v363 = vrot.slane %v354, %v362
  %366 = vmatprep.subr.mxu0 %v321
  %367 = vmatpush1.msra.mxu0 %v320
  %368 = vmatprep.subr.mxu0 %v319
  %369 = vmatpush1.msra.mxu0 %v318
  %370 = vmatprep.subr.mxu0 %v317
  %371 = vmatpush1.msra.mxu0 %v316
  %372 = vmatprep.subr.mxu0 %v315
  %373 = vmatpush1.msra.mxu0 %v314
  %374 = vmatprep.subr.mxu0 %v313
  %375 = vmatpush1.msra.mxu0 %v312
  %376 = vmatprep.subr.mxu0 %v311
  %377 = vmatpush1.msra.mxu0 %v310
  %378 = vmatprep.subr.mxu0 %v309
  %379 = vmatpush1.msra.mxu0 %v308
  %380 = vmatprep.subr.mxu0 %v307
  %381 = vmatpush1.msra.mxu0 %v306
  %382 = vmatprep.subr.mxu0 %v305
  %383 = vmatpush1.msra.mxu0 %v304
  %384 = vmatprep.subr.mxu0 %v303
  %385 = vmatpush1.msra.mxu0 %v302
  %386 = vmatprep.subr.mxu0 %v301
  %387 = vmatpush1.msra.mxu0 %v300
  %388 = vmatprep.subr.mxu0 %v299
  %389 = vmatpush1.msra.mxu0 %v298
  %390 = vmatprep.subr.mxu0 %v297
  %391 = vmatpush1.msra.mxu0 %v296
  %392 = vmatprep.subr.mxu0 %v295
  %393 = vmatpush1.msra.mxu0 %v294
  %394 = vmatprep.subr.mxu0 %v293
  %395 = vmatpush1.msra.mxu0 %v292
  %396 = vmatprep.subr.mxu0 %v291
  %397 = vmatpush1.msra.mxu0 %v290
  %398 = vmatprep.subr.mxu0 %v353
  %399 = vmatpush2.msra.mxu0 %v352
  %400 = vmatprep.subr.mxu0 %v351
  %401 = vmatpush2.msra.mxu0 %v350
  %402 = vmatprep.subr.mxu0 %v349
  %403 = vmatpush2.msra.mxu0 %v348
  %404 = vmatprep.subr.mxu0 %v347
  %405 = vmatpush2.msra.mxu0 %v346
  %406 = vmatprep.subr.mxu0 %v345
  %407 = vmatpush2.msra.mxu0 %v344
  %408 = vmatprep.subr.mxu0 %v343
  %409 = vmatpush2.msra.mxu0 %v342
  %410 = vmatprep.subr.mxu0 %v341
  %411 = vmatpush2.msra.mxu0 %v340
  %412 = vmatprep.subr.mxu0 %v339
  %413 = vmatpush2.msra.mxu0 %v338
  %414 = vmatprep.subr.mxu0 %v337
  %415 = vmatpush2.msra.mxu0 %v336
  %416 = vmatprep.subr.mxu0 %v335
  %417 = vmatpush2.msra.mxu0 %v334
  %418 = vmatprep.subr.mxu0 %v333
  %419 = vmatpush2.msra.mxu0 %v332
  %420 = vmatprep.subr.mxu0 %v331
  %421 = vmatpush2.msra.mxu0 %v330
  %422 = vmatprep.subr.mxu0 %v329
  %423 = vmatpush2.msra.mxu0 %v328
  %424 = vmatprep.subr.mxu0 %v327
  %425 = vmatpush2.msra.mxu0 %v326
  %426 = vmatprep.subr.mxu0 %v325
  %427 = vmatpush2.msra.mxu0 %v324
  %428 = vmatprep.subr.mxu0 %v323
  %429 = vmatpush2.msra.mxu0 %v322
  %430 = vmatprep.mubr.f32.mxu0 %v287
  %431 = vmatmul.mubr.f32.gmra.mxu0 %v286
  %v432 = vpop.f32.mrf.mxu0
  %v433 = vadd.f32 %v359, %v432
  %v434 = vpop.f32.mrf.mxu0
  %v435 = vadd.f32 %v363, %v434
  %436 = vmatprep.mubr.f32.mxu0 %v289
  %437 = vmatmul.mubr.f32.gmra.mxu0 %v288
  %v438 = vpop.f32.mrf.mxu0
  %v439 = vadd.f32 %v359, %v438
  %v440 = vpop.f32.mrf.mxu0
  %v441 = vadd.f32 %v363, %v440
  %442 = vdwg.mxu0
  %v443 = vmax.f32 %v433, 0.0
  %v444 = vmax.f32 %v435, 0.0
  %v445 = vmax.f32 %v439, 0.0
  %v446 = vmax.f32 %v441, 0.0
  %v447 = vld [vmem:[%s7] sm:$0xff]
  %v448 = vld [vmem:[%s7 + $0x8] sm:$0xff]
  %v449 = vld [vmem:[%s7 + $0x10] sm:$0xff]
  %v450 = vld [vmem:[%s7 + $0x18] sm:$0xff]
  %v451 = vld [vmem:[%s7 + $0x20] sm:$0xff]
  %v452 = vld [vmem:[%s7 + $0x28] sm:$0xff]
  %v453 = vld [vmem:[%s7 + $0x30] sm:$0xff]
  %v454 = vld [vmem:[%s7 + $0x38] sm:$0xff]
  %v455 = vld [vmem:[%s7 + $0x40] sm:$0xff]
  %v456 = vld [vmem:[%s7 + $0x48] sm:$0xff]
  %v457 = vld [vmem:[%s7 + $0x50] sm:$0xff]
  %v458 = vld [vmem:[%s7 + $0x58] sm:$0xff]
  %v459 = vld [vmem:[%s7 + $0x60] sm:$0xff]
  %v460 = vld [vmem:[%s7 + $0x68] sm:$0xff]
  %v461 = vld [vmem:[%s7 + $0x70] sm:$0xff]
  %v462 = vld [vmem:[%s7 + $0x78] sm:$0xff]
  %v463 = vld [vmem:[%s7 + $0x80] sm:$0xff]
  %v464 = vld [vmem:[%s7 + $0x88] sm:$0xff]
  %v465 = vld [vmem:[%s7 + $0x90] sm:$0xff]
  %v466 = vld [vmem:[%s7 + $0x98] sm:$0xff]
  %v467 = vld [vmem:[%s7 + $0xa0] sm:$0xff]
  %v468 = vld [vmem:[%s7 + $0xa8] sm:$0xff]
  %v469 = vld [vmem:[%s7 + $0xb0] sm:$0xff]
  %v470 = vld [vmem:[%s7 + $0xb8] sm:$0xff]
  %v471 = vld [vmem:[%s8] sm:$0x1]
  %v473 = vlaneseq
  %v474 = vshrl.u32 %v473, 7
  %v475 = vsub.s32 0, %v474
  %v476 = vrot.slane %v471, %v475
  %v479 = vsel %vm202, %v444, 0
  %v482 = vsel %vm202, %v446, 0
  %484 = vmatprep.subr.mxu0 0.0
  %485 = vmatpush1.msra.mxu0 %v462
  %486 = vmatprep.subr.mxu0 0.0
  %487 = vmatpush1.msra.mxu0 %v461
  %488 = vmatprep.subr.mxu0 0.0
  %489 = vmatpush1.msra.mxu0 %v460
  %490 = vmatprep.subr.mxu0 0.0
  %491 = vmatpush1.msra.mxu0 %v459
  %492 = vmatprep.subr.mxu0 0.0
  %493 = vmatpush1.msra.mxu0 %v458
  %494 = vmatprep.subr.mxu0 0.0
  %495 = vmatpush1.msra.mxu0 %v457
  %496 = vmatprep.subr.mxu0 0.0
  %497 = vmatpush1.msra.mxu0 %v456
  %498 = vmatprep.subr.mxu0 0.0
  %499 = vmatpush1.msra.mxu0 %v455
  %500 = vmatprep.subr.mxu0 0.0
  %501 = vmatpush1.msra.mxu0 %v454
  %502 = vmatprep.subr.mxu0 0.0
  %503 = vmatpush1.msra.mxu0 %v453
  %504 = vmatprep.subr.mxu0 0.0
  %505 = vmatpush1.msra.mxu0 %v452
  %506 = vmatprep.subr.mxu0 0.0
  %507 = vmatpush1.msra.mxu0 %v451
  %508 = vmatprep.subr.mxu0 0.0
  %509 = vmatpush1.msra.mxu0 %v450
  %510 = vmatprep.subr.mxu0 0.0
  %511 = vmatpush1.msra.mxu0 %v449
  %512 = vmatprep.subr.mxu0 0.0
  %513 = vmatpush1.msra.mxu0 %v448
  %514 = vmatprep.subr.mxu0 0.0
  %515 = vmatpush1.msra.mxu0 %v447
  %516 = vmatprep.subr.mxu0 0.0
  %517 = vmatpush2.msra.mxu0 0.0
  %518 = vmatprep.subr.mxu0 0.0
  %519 = vmatpush2.msra.mxu0 0.0
  %520 = vmatprep.subr.mxu0 0.0
  %521 = vmatpush2.msra.mxu0 0.0
  %522 = vmatprep.subr.mxu0 0.0
  %523 = vmatpush2.msra.mxu0 0.0
  %524 = vmatprep.subr.mxu0 0.0
  %525 = vmatpush2.msra.mxu0 0.0
  %526 = vmatprep.subr.mxu0 0.0
  %527 = vmatpush2.msra.mxu0 0.0
  %528 = vmatprep.subr.mxu0 0.0
  %529 = vmatpush2.msra.mxu0 0.0
  %530 = vmatprep.subr.mxu0 0.0
  %531 = vmatpush2.msra.mxu0 0.0
  %532 = vmatprep.subr.mxu0 0.0
  %533 = vmatpush2.msra.mxu0 %v470
  %534 = vmatprep.subr.mxu0 0.0
  %535 = vmatpush2.msra.mxu0 %v469
  %536 = vmatprep.subr.mxu0 0.0
  %537 = vmatpush2.msra.mxu0 %v468
  %538 = vmatprep.subr.mxu0 0.0
  %539 = vmatpush2.msra.mxu0 %v467
  %540 = vmatprep.subr.mxu0 0.0
  %541 = vmatpush2.msra.mxu0 %v466
  %542 = vmatprep.subr.mxu0 0.0
  %543 = vmatpush2.msra.mxu0 %v465
  %544 = vmatprep.subr.mxu0 0.0
  %545 = vmatpush2.msra.mxu0 %v464
  %546 = vmatprep.subr.mxu0 0.0
  %547 = vmatpush2.msra.mxu0 %v463
  %548 = vmatprep.mubr.f32.mxu0 %v479
  %549 = vmatmul.mubr.f32.gmra.mxu0 %v443
  %v550 = vpop.f32.mrf.mxu0
  %v551 = vadd.f32 %v476, %v550
  %v552 = vpop.f32.mrf.mxu0
  %553 = vmatprep.mubr.f32.mxu0 %v482
  %554 = vmatmul.mubr.f32.gmra.mxu0 %v445
  %v555 = vpop.f32.mrf.mxu0
  %v556 = vadd.f32 %v476, %v555
  %v557 = vpop.f32.mrf.mxu0
  %558 = vdwg.mxu0
  %vm559 = vcmask 7168
  %560 = vst.msk [vmem:[%s9] sm:$0xff] %vm559, %v551
  %561 = vst.msk [vmem:[%s9 + $0x8] sm:$0xff] %vm559, %v556
  %v562 = vmul.f32 %v551, 0.001
  %v563 = vmul.f32 %v556, 0.001
  %v564 = vxor.u32 %v562, 2147483648
  %v565 = vxor.u32 %v563, 2147483648
  %v566 = vmul.f32 %v564, 1.442695
  %v567 = vpow.pop %v566
  %v568 = vmul.f32 %v565, 1.442695
  %v569 = vpow.pop %v568
  %v570 = vadd.f32 %v567, 1.0
  %v571 = vadd.f32 %v569, 1.0
  %v572 = vrcp.pop %v570
  %v573 = vmul.f32 1.0, %v572
  %v574 = vrcp.pop %v571
  %v575 = vmul.f32 1.0, %v574
  %v576 = vmul.f32 %v573, 40.0
  %v577 = vmul.f32 %v575, 40.0
  %v578 = vadd.f32 %v576, 10.0
  %v579 = vadd.f32 %v577, 10.0
  %vm580 = vcmask 15368
  %581 = vst.msk [vmem:[%s9] sm:$0xff] %vm580, %v578
  %582 = vst.msk [vmem:[%s9 + $0x8] sm:$0xff] %vm580, %v579
  // Predicated region
  $region38: #{tpu_custom_call.1} parent=0 // pred_check
    _
  $region39: #{tpu_custom_call.1} parent=0 // pred_check_branch
    %584 = sbr.rel (0) target = $region41
  $region40: #{tpu_custom_call.1} parent=0 // pred_region
    _
  $region41: #{tpu_custom_call.1} parent=0 // pred_fallthru
    _
  // Predicated region
  $region42: #{tpu_custom_call.1} parent=0 // pred_check
    _
  $region43: #{tpu_custom_call.1} parent=0 // pred_check_branch
    %586 = sbr.rel (0) target = $region45
  $region44: #{tpu_custom_call.1} parent=0 // pred_region
    _
  $region45: #{tpu_custom_call.1} parent=0 // pred_fallthru
    _

</llo_original>
